<compile_context>
chip_gen: v5e
topology: v5e:2x2
jax: 0.10.0
libtpu: 0.0.40
codegen_flags: <defaults>
</compile_context>

<pallas_src>
import functools

import jax
import jax.numpy as jnp
from jax.experimental import pallas as pl
from jax.experimental.pallas import tpu as pltpu

LANE = 128     # vreg lane width
SUBLANE = 8    # f32 sublane count


def _round_up(n, m):
    return (n + m - 1) // m * m


def policy_net_kernel(x_ref, w1_ref, b1_ref, w2_ref, b2_ref, out_ref, *, action_dim):
    # Layer 1: Linear(state -> hidden) + ReLU.  bf16 operands, f32 accumulation.
    x = x_ref[...].astype(jnp.bfloat16)
    h = jnp.dot(x, w1_ref[...], preferred_element_type=jnp.float32)
    h = jnp.maximum(h + b1_ref[...], 0.0)            # bias + ReLU in f32 (VPU)

    # Layer 2: Linear(hidden -> action_pad).
    logits = jnp.dot(h.astype(jnp.bfloat16), w2_ref[...],
                     preferred_element_type=jnp.float32)
    logits = logits + b2_ref[...]

    # Mask lane-padding columns so the softmax normalizes over real actions only.
    col = jax.lax.broadcasted_iota(jnp.int32, logits.shape, dimension=1)
    logits = jnp.where(col < action_dim, logits, -1e30)

    # Numerically stable softmax over dim=1; divide -> EUP approx reciprocal.
    m = jnp.max(logits, axis=1, keepdims=True)
    e = jnp.exp(logits - m)
    denom = jnp.sum(e, axis=1, keepdims=True)
    out_ref[...] = (e * pl.reciprocal(denom, approx=True)).astype(out_ref.dtype)


def policy_net_discrete(x, w1, b1, w2, b2):
    """x: (B, state_dim) f32; w1: (state, hidden) bf16; b1: (1, hidden) f32;
       w2: (hidden, action) bf16; b2: (1, action) f32 -> probs (B, action) f32."""
    B, S = x.shape
    H, A = w2.shape
    assert w1.shape == (S, H) and b1.shape == (1, H) and b2.shape == (1, A)

    # Lane-dense output layout: pad the tiny action axis up to a full 128-lane row.
    A_pad = _round_up(A, LANE)
    # Batch tile: up to 512 rows for good HBM streaming; sublane-aligned for small B.
    TB = min(512, _round_up(B, SUBLANE))
    B_pad = _round_up(B, TB)

    x_p = jnp.pad(x, ((0, B_pad - B), (0, 0))) if B_pad != B else x
    w2_p = jnp.pad(w2, ((0, 0), (0, A_pad - A))) if A_pad != A else w2
    b2_p = jnp.pad(b2, ((0, 0), (0, A_pad - A))) if A_pad != A else b2

    grid = (B_pad // TB,)
    kernel = functools.partial(policy_net_kernel, action_dim=A)

    bytes_accessed = (x_p.size * x_p.dtype.itemsize
                      + w1.size * w1.dtype.itemsize
                      + b1.size * b1.dtype.itemsize
                      + w2_p.size * w2_p.dtype.itemsize
                      + b2_p.size * b2_p.dtype.itemsize
                      + B_pad * A_pad * 4)
    cost = pl.CostEstimate(
        flops=2 * B_pad * (S * H + H * A_pad),
        transcendentals=B_pad * (A_pad + 1),     # exp + approx reciprocal
        bytes_accessed=bytes_accessed,
    )

    # NOTE(v7x): for large hidden dims, size TB so double-buffered x/out tiles plus
    # the (TB, H) f32 intermediate stay under the ~32 MiB scoped-VMEM default (raise
    # vmem_limit_bytes if needed); at these shapes the defaults are ample.
    out = pl.pallas_call(
        kernel,
        out_shape=jax.ShapeDtypeStruct((B_pad, A_pad), jnp.float32),
        grid=grid,
        in_specs=[
            pl.BlockSpec((TB, S), lambda i: (i, 0)),      # x: streamed per batch tile
            pl.BlockSpec((S, H), lambda i: (0, 0)),       # w1: resident
            pl.BlockSpec((1, H), lambda i: (0, 0)),       # b1: resident
            pl.BlockSpec((H, A_pad), lambda i: (0, 0)),   # w2: resident
            pl.BlockSpec((1, A_pad), lambda i: (0, 0)),   # b2: resident
        ],
        out_specs=pl.BlockSpec((TB, A_pad), lambda i: (i, 0)),
        compiler_params=pltpu.CompilerParams(
            dimension_semantics=("parallel",),            # batch tiles shard across TCs on v7x
        ),
        cost_estimate=cost,
    )(x_p, w1, b1, w2_p, b2_p)

    return out[:B, :A]


def init_params(key, state_dim, hidden_dim, action_dim):
    """Deterministic init mimicking PyTorch nn.Linear default (uniform +-1/sqrt(fan_in)).
       Weights stored (in, out) in bf16 for the MXU; biases kept in f32."""
    k1, k2, k3, k4 = jax.random.split(key, 4)
    lim1 = 1.0 / jnp.sqrt(state_dim)
    lim2 = 1.0 / jnp.sqrt(hidden_dim)
    w1 = jax.random.uniform(k1, (state_dim, hidden_dim), jnp.float32, -lim1, lim1)
    b1 = jax.random.uniform(k2, (1, hidden_dim), jnp.float32, -lim1, lim1)
    w2 = jax.random.uniform(k3, (hidden_dim, action_dim), jnp.float32, -lim2, lim2)
    b2 = jax.random.uniform(k4, (1, action_dim), jnp.float32, -lim2, lim2)
    return w1.astype(jnp.bfloat16), b1, w2.astype(jnp.bfloat16), b2


if __name__ == "__main__":
    state_dim, hidden_dim, action_dim = 16, 32, 8
    batch = 2

    key = jax.random.PRNGKey(0)
    kx, kp = jax.random.split(key)
    x = jax.random.normal(kx, (batch, state_dim), jnp.float32)
    w1, b1, w2, b2 = init_params(kp, state_dim, hidden_dim, action_dim)

    probs = policy_net_discrete(x, w1, b1, w2, b2)
    jax.block_until_ready(probs)

    # Reference in plain JAX with the same numerical recipe (bf16 matmuls, f32 rest).
    h_ref = jnp.maximum(
        jnp.dot(x.astype(jnp.bfloat16), w1, preferred_element_type=jnp.float32) + b1, 0.0)
    logits_ref = jnp.dot(
        h_ref.astype(jnp.bfloat16), w2, preferred_element_type=jnp.float32) + b2
    probs_ref = jax.nn.softmax(logits_ref, axis=1)

    # Full-f32 reference (exact PyTorch semantics) with a looser tolerance to
    # confirm the bf16 MXU path keeps the module's forward-pass behaviour.
    h_f32 = jnp.maximum(x @ w1.astype(jnp.float32) + b1, 0.0)
    probs_f32 = jax.nn.softmax(h_f32 @ w2.astype(jnp.float32) + b2, axis=1)

    assert probs.shape == (batch, action_dim)
    # Tolerance covers the EUP approx-reciprocal (~1e-4 rel) in the kernel softmax.
    assert jnp.allclose(probs, probs_ref, atol=2e-3), "mismatch vs bf16 reference"
    assert jnp.allclose(probs, probs_f32, atol=2e-2), "mismatch vs f32 reference"
    assert jnp.allclose(jnp.sum(probs, axis=1), 1.0, atol=2e-3), "rows must sum to 1"

    print("KERNEL_OK")
</pallas_src>

<mosaic_0001>
module attributes {stable_mosaic.version = 11 : i64} {
  func.func @policy_net_kernel(%arg0: i32, %arg1: memref<8x16xf32, #tpu.memory_space<vmem>>, %arg2: memref<16x32xbf16, #tpu.memory_space<vmem>>, %arg3: memref<1x32xf32, #tpu.memory_space<vmem>>, %arg4: memref<32x128xbf16, #tpu.memory_space<vmem>>, %arg5: memref<1x128xf32, #tpu.memory_space<vmem>>, %arg6: memref<8x128xf32, #tpu.memory_space<vmem>>) attributes {dimension_semantics = [#tpu.dimension_semantics<parallel>], iteration_bounds = array<i64: 1>, scalar_prefetch = 0 : i64, scratch_operands = 0 : i64, tpu.core_type = #tpu.core_type<tc>, window_params = [{transform_indices = @transform_0, window_bounds = array<i64: 8, 16>}, {pipeline_mode = #tpu.pipeline_mode<synchronous>, transform_indices = @transform_1, window_bounds = array<i64: 16, 32>}, {pipeline_mode = #tpu.pipeline_mode<synchronous>, transform_indices = @transform_2, window_bounds = array<i64: 1, 32>}, {pipeline_mode = #tpu.pipeline_mode<synchronous>, transform_indices = @transform_3, window_bounds = array<i64: 32, 128>}, {pipeline_mode = #tpu.pipeline_mode<synchronous>, transform_indices = @transform_4, window_bounds = array<i64: 1, 128>}, {transform_indices = @transform_5, window_bounds = array<i64: 8, 128>}]} {
    %c0 = arith.constant 0 : index
    %c0_0 = arith.constant 0 : index
    %0 = vector.load %arg1[%c0, %c0_0] : memref<8x16xf32, #tpu.memory_space<vmem>>, vector<8x16xf32>
    %1 = arith.truncf %0 : vector<8x16xf32> to vector<8x16xbf16>
    %c0_1 = arith.constant 0 : index
    %c0_2 = arith.constant 0 : index
    %2 = vector.load %arg2[%c0_1, %c0_2] : memref<16x32xbf16, #tpu.memory_space<vmem>>, vector<16x32xbf16>
    %cst = arith.constant dense<0.000000e+00> : vector<8x32xf32>
    %3 = tpu.matmul %1, %2, %cst {dimension_numbers = #tpu.dot_dimension_numbers<[1], [0], [0], [1], [0, 0, 1, 1], [], []>} : vector<8x16xbf16>, vector<16x32xbf16>, vector<8x32xf32> -> vector<8x32xf32>
    %c0_3 = arith.constant 0 : index
    %c0_4 = arith.constant 0 : index
    %4 = vector.load %arg3[%c0_3, %c0_4] : memref<1x32xf32, #tpu.memory_space<vmem>>, vector<1x32xf32>
    %5 = vector.broadcast %4 : vector<1x32xf32> to vector<8x32xf32>
    %6 = arith.addf %3, %5 : vector<8x32xf32>
    %cst_5 = arith.constant 0.000000e+00 : f32
    %7 = vector.broadcast %cst_5 : f32 to vector<8x32xf32>
    %8 = arith.maximumf %6, %7 : vector<8x32xf32>
    %9 = arith.truncf %8 : vector<8x32xf32> to vector<8x32xbf16>
    %c0_6 = arith.constant 0 : index
    %c0_7 = arith.constant 0 : index
    %10 = vector.load %arg4[%c0_6, %c0_7] : memref<32x128xbf16, #tpu.memory_space<vmem>>, vector<32x128xbf16>
    %cst_8 = arith.constant dense<0.000000e+00> : vector<8x128xf32>
    %11 = tpu.matmul %9, %10, %cst_8 {dimension_numbers = #tpu.dot_dimension_numbers<[1], [0], [0], [1], [0, 0, 1, 1], [], []>} : vector<8x32xbf16>, vector<32x128xbf16>, vector<8x128xf32> -> vector<8x128xf32>
    %c0_9 = arith.constant 0 : index
    %c0_10 = arith.constant 0 : index
    %12 = vector.load %arg5[%c0_9, %c0_10] : memref<1x128xf32, #tpu.memory_space<vmem>>, vector<1x128xf32>
    %13 = vector.broadcast %12 : vector<1x128xf32> to vector<8x128xf32>
    %14 = arith.addf %11, %13 : vector<8x128xf32>
    %15 = tpu.iota {dimensions = array<i32: 1>} : vector<8x128xi32>
    %c8_i32 = arith.constant 8 : i32
    %16 = vector.broadcast %c8_i32 : i32 to vector<8x128xi32>
    %17 = arith.cmpi slt, %15, %16 : vector<8x128xi32>
    %cst_11 = arith.constant -1.000000e+30 : f32
    %18 = vector.broadcast %cst_11 : f32 to vector<8x128xf32>
    %19 = arith.select %17, %14, %18 : vector<8x128xi1>, vector<8x128xf32>
    %cst_12 = arith.constant dense<0xFF800000> : vector<8xf32>
    %20 = vector.multi_reduction <maximumf>, %19, %cst_12 [1] : vector<8x128xf32> to vector<8xf32>
    %21 = vector.shape_cast %20 : vector<8xf32> to vector<8x1xf32>
    %22 = vector.broadcast %21 : vector<8x1xf32> to vector<8x128xf32>
    %23 = arith.subf %19, %22 : vector<8x128xf32>
    %24 = math.exp %23 : vector<8x128xf32>
    %cst_13 = arith.constant dense<0.000000e+00> : vector<8xf32>
    %25 = vector.multi_reduction <add>, %24, %cst_13 [1] : vector<8x128xf32> to vector<8xf32>
    %26 = vector.shape_cast %25 : vector<8xf32> to vector<8x1xf32>
    %27 = tpu.reciprocal %26 {approx = true} : vector<8x1xf32> -> vector<8x1xf32>
    %28 = vector.broadcast %27 : vector<8x1xf32> to vector<8x128xf32>
    %29 = arith.mulf %24, %28 : vector<8x128xf32>
    %c0_14 = arith.constant 0 : index
    %c0_15 = arith.constant 0 : index
    %30 = vector.load %arg6[%c0_14, %c0_15] : memref<8x128xf32, #tpu.memory_space<vmem>>, vector<8x128xf32>
    tpu.vector_store %arg6[%c0_14, %c0_15], %29 {strides = array<i32>} : memref<8x128xf32, #tpu.memory_space<vmem>>, vector<8x128xf32>,
    return
  }
  func.func @transform_0(%arg0: i32) -> (i32, i32) {
    %c0_i32 = arith.constant 0 : i32
    %c0_i32_0 = arith.constant 0 : i32
    return %arg0, %c0_i32 : i32, i32
  }
  func.func @transform_1(%arg0: i32) -> (i32, i32) {
    %c0_i32 = arith.constant 0 : i32
    %c0_i32_0 = arith.constant 0 : i32
    %c0_i32_1 = arith.constant 0 : i32
    return %c0_i32, %c0_i32_0 : i32, i32
  }
  func.func @transform_2(%arg0: i32) -> (i32, i32) {
    %c0_i32 = arith.constant 0 : i32
    %c0_i32_0 = arith.constant 0 : i32
    %c0_i32_1 = arith.constant 0 : i32
    return %c0_i32, %c0_i32_0 : i32, i32
  }
  func.func @transform_3(%arg0: i32) -> (i32, i32) {
    %c0_i32 = arith.constant 0 : i32
    %c0_i32_0 = arith.constant 0 : i32
    %c0_i32_1 = arith.constant 0 : i32
    return %c0_i32, %c0_i32_0 : i32, i32
  }
  func.func @transform_4(%arg0: i32) -> (i32, i32) {
    %c0_i32 = arith.constant 0 : i32
    %c0_i32_0 = arith.constant 0 : i32
    %c0_i32_1 = arith.constant 0 : i32
    return %c0_i32, %c0_i32_0 : i32, i32
  }
  func.func @transform_5(%arg0: i32) -> (i32, i32) {
    %c0_i32 = arith.constant 0 : i32
    %c0_i32_0 = arith.constant 0 : i32
    return %arg0, %c0_i32 : i32, i32
  }
}

</mosaic_0001>

<llo_original>
// kernel: tpu_custom_call.1
$region0: #{tpu_custom_call.1}
  #allocation0 [shape = 'u32[]', space=smem, size = 0x4, offset = 0x4, fixed_abs, tag = 'smem constant byte address 0x4 - core index']
  #allocation1 [shape = 'u32[72,128]{1,0:T(1,128)}', space=vmem, size = 0x9000, scoped, tag = 'internal scratch']
  %s0 = inlined_call_operand.hbm [shape: f32[8,16], index: 0, kind: input, shape index: {}]
  %s1 = inlined_call_operand.hbm [shape: bf16[16,32], index: 1, kind: input, shape index: {}]
  %s2 = inlined_call_operand.vmem [shape: f32[1,32], index: 2, kind: input, shape index: {}]
  %s3 = inlined_call_operand.hbm [shape: bf16[32,128], index: 3, kind: input, shape index: {}]
  %s4 = inlined_call_operand.vmem [shape: f32[1,128], index: 4, kind: input, shape index: {}]
  %s5 = inlined_call_operand.hbm [shape: f32[8,128], index: 5, kind: output, shape index: {}]
  %s6 = sld [smem:[#allocation0]]
  $region42: #{tpu_custom_call.1} parent=0
    _
  %s8 = ssub.s32 1, %s6
  %s9 = scalar_select 0, %s8, %s6
  $region1: #{tpu_custom_call.1} parent=0
    #allocation2 [shape = 'u8[4096]{0}', space=vmem, size = 0x1000, scoped, tag = 'input window, operand 0, single buffered']
    #allocation3 [shape = 's32[1]{0}', space=sflag, size = 0x4, scoped, tag = 'scoped memory for tpu_custom_call.1']
    #allocation4 [shape = 's32[1]{0}', space=sflag, size = 0x4, scoped, tag = 'scoped memory for tpu_custom_call.1']
    #allocation5 [shape = 'u8[4096]{0}', space=vmem, size = 0x1000, scoped, tag = 'input window, operand 1, single buffered']
    #allocation6 [shape = 's32[1]{0}', space=sflag, size = 0x4, scoped, tag = 'scoped memory for tpu_custom_call.1']
    #allocation7 [shape = 'u8[8192]{0}', space=vmem, size = 0x2000, scoped, tag = 'input window, operand 3, single buffered']
    #allocation8 [shape = 'u8[4096]{0}', space=vmem, size = 0x1000, scoped, tag = 'output window, operand 0, single buffered']
    %10 = vsyncpa [#allocation3], 0
    %11 = vsyncpa [#allocation6], 0
    %12 = vsyncpa [#allocation4], 0
    // Predicated region
    $region2: #{tpu_custom_call.1} parent=1 // pred_check
      _
    $region3: #{tpu_custom_call.1} parent=1 // pred_check_branch
      %14 = sbr.rel (0) target = $region5
    $region4: #{tpu_custom_call.1} parent=1 // pred_region
      %16 = vsyncadd [#allocation3], 0
      %s18 = sshll.u32 %s0, 4
      %s19 = int_to_ptr.hbm [resolvable:$true] %s18
      %s20 = sshll.u32 [#allocation2], 4
      %s21 = int_to_ptr.vmem [resolvable:$true] %s20
      %23 = dma.hbm_to_vmem [thread:$0]  %s19, 128, %s21, [#allocation3]
    $region5: #{tpu_custom_call.1} parent=1 // pred_fallthru
      _
    // Predicated region
    $region6: #{tpu_custom_call.1} parent=1 // pred_check
      _
    $region7: #{tpu_custom_call.1} parent=1 // pred_check_branch
      %25 = sbr.rel (0) target = $region9
    $region8: #{tpu_custom_call.1} parent=1 // pred_region
      %27 = vsyncadd [#allocation6], 0
      %s28 = sshll.u32 %s1, 4
      %s29 = int_to_ptr.hbm [resolvable:$true] %s28
      %s30 = sshll.u32 [#allocation5], 4
      %s31 = int_to_ptr.vmem [resolvable:$true] %s30
      %36 = dma.hbm_to_vmem [thread:$0]  %s29, 128, %s31, [#allocation6], 64, 64, 4
    $region9: #{tpu_custom_call.1} parent=1 // pred_fallthru
      _
    // Predicated region
    $region10: #{tpu_custom_call.1} parent=1 // pred_check
      _
    $region11: #{tpu_custom_call.1} parent=1 // pred_check_branch
      %38 = sbr.rel (0) target = $region13
    $region12: #{tpu_custom_call.1} parent=1 // pred_region
      _
    $region13: #{tpu_custom_call.1} parent=1 // pred_fallthru
      _
    // Predicated region
    $region14: #{tpu_custom_call.1} parent=1 // pred_check
      _
    $region15: #{tpu_custom_call.1} parent=1 // pred_check_branch
      %40 = sbr.rel (0) target = $region17
    $region16: #{tpu_custom_call.1} parent=1 // pred_region
      %42 = vsyncadd [#allocation6], 0
      %s43 = sshll.u32 %s3, 4
      %s44 = int_to_ptr.hbm [resolvable:$true] %s43
      %s45 = sshll.u32 [#allocation7], 4
      %s46 = int_to_ptr.vmem [resolvable:$true] %s45
      %51 = dma.hbm_to_vmem [thread:$0]  %s44, 256, %s46, [#allocation6], 64, 64, 4
    $region17: #{tpu_custom_call.1} parent=1 // pred_fallthru
      _
    // Predicated region
    $region18: #{tpu_custom_call.1} parent=1 // pred_check
      _
    $region19: #{tpu_custom_call.1} parent=1 // pred_check_branch
      %53 = sbr.rel (0) target = $region21
    $region20: #{tpu_custom_call.1} parent=1 // pred_region
      _
    $region21: #{tpu_custom_call.1} parent=1 // pred_fallthru
      _
    // Predicated region
    $region22: #{tpu_custom_call.1} parent=1 // pred_check
      _
    $region23: #{tpu_custom_call.1} parent=1 // pred_check_branch
      %55 = sbr.rel (0) target = $region25
    $region24: #{tpu_custom_call.1} parent=1 // pred_region
      %57 = dma.done [#allocation3], 128
    $region25: #{tpu_custom_call.1} parent=1 // pred_fallthru
      _
    // Predicated region
    $region26: #{tpu_custom_call.1} parent=1 // pred_check
      _
    $region27: #{tpu_custom_call.1} parent=1 // pred_check_branch
      %59 = sbr.rel (0) target = $region29
    $region28: #{tpu_custom_call.1} parent=1 // pred_region
      %61 = dma.done [#allocation6], 128
    $region29: #{tpu_custom_call.1} parent=1 // pred_fallthru
      _
    // Predicated region
    $region30: #{tpu_custom_call.1} parent=1 // pred_check
      _
    $region31: #{tpu_custom_call.1} parent=1 // pred_check_branch
      %63 = sbr.rel (0) target = $region33
    $region32: #{tpu_custom_call.1} parent=1 // pred_region
      %65 = dma.done [#allocation6], 256
    $region33: #{tpu_custom_call.1} parent=1 // pred_fallthru
      _
    %v67 = vld [vmem:[#allocation2] sm:$0xff]
    %v68 = vpack.c.bf16 %v67, %v67
    %v69 = vld [vmem:[#allocation5] sm:$0xf]
    %v70 = vld [vmem:[#allocation5 + $0x4] sm:$0xf]
    %v71 = vld [vmem:[%s2] sm:$0x1]
    %v73 = vperm.slane %v71, 0
    %v77 = vunpack.c.l.b16 %v69
    %v78 = vunpack.c.l.b16 %v70
    %v79 = vpack.c.b16 %v78, %v77
    %vm81 = vcmask 130048
    %v83 = vsel %vm81, %v68, 0
    %85 = vmatpush.bf16.msra.mxu0 0
    %86 = vmatpush.bf16.msra.mxu0 0
    %87 = vmatpush.bf16.msra.mxu0 0
    %88 = vmatpush.bf16.msra.mxu0 0
    %89 = vmatpush.bf16.msra.mxu0 0
    %90 = vmatpush.bf16.msra.mxu0 0
    %91 = vmatpush.bf16.msra.mxu0 0
    %92 = vmatpush.bf16.msra.mxu0 %v79
    %93 = vmatmul.bf16.gmra.mxu0 %v83
    %v94 = vpop.f32.mrf.mxu0
    %v95 = vadd.f32 %v73, %v94
    %v96 = vpop.f32.mrf.mxu0
    %97 = vdwg.mxu0
    %v98 = vmax.f32 %v95, 0.0
    %v99 = vpack.c.bf16 %v98, %v98
    %v100 = vld [vmem:[#allocation7] sm:$0xf]
    %v101 = vld [vmem:[#allocation7 + $0x4] sm:$0xf]
    %v102 = vld [vmem:[#allocation7 + $0x8] sm:$0xf]
    %v103 = vld [vmem:[#allocation7 + $0xc] sm:$0xf]
    %v104 = vld [vmem:[%s4] sm:$0x1]
    %v106 = vperm.slane %v104, 0
    %v112 = vunpack.c.l.b16 %v100
    %v113 = vunpack.c.l.b16 %v101
    %v114 = vunpack.c.l.b16 %v102
    %v115 = vunpack.c.l.b16 %v103
    %v116 = vpack.c.b16 %v113, %v112
    %v117 = vpack.c.b16 %v115, %v114
    %vm120 = vcmask 261120
    %v122 = vsel %vm120, %v99, 0
    %124 = vmatpush.bf16.msra.mxu0 0
    %125 = vmatpush.bf16.msra.mxu0 0
    %126 = vmatpush.bf16.msra.mxu0 0
    %127 = vmatpush.bf16.msra.mxu0 0
    %128 = vmatpush.bf16.msra.mxu0 0
    %129 = vmatpush.bf16.msra.mxu0 0
    %130 = vmatpush.bf16.msra.mxu0 %v117
    %131 = vmatpush.bf16.msra.mxu0 %v116
    %132 = vmatmul.bf16.gmra.mxu0 %v122
    %v133 = vpop.f32.mrf.mxu0
    %v134 = vadd.f32 %v106, %v133
    %v135 = vpop.f32.mrf.mxu0
    %136 = vdwg.mxu0
    %v137 = vlaneseq
    %v138 = vand.u32 %v137, 127
    %vm139 = vcmp.lt.s32.totalorder %v138, 8
    %v140 = vsel %vm139, %v134, -1e+30
    %141 = vmax.xlane.f32.xlu0 %v140
    %v142 = vpop.xlane.xlu0 %141
    %v143 = vsub.f32 %v140, %v142
    %v144 = vmul.f32 %v143, 1.442695
    %v145 = vpow.pop %v144
    %146 = vadd.xlane.f32.xlu0 %v145
    %v147 = vpop.xlane.xlu0 %146
    %v148 = vrcp.pop %v147
    %v149 = vmul.f32 %v145, %v148
    %150 = vst [vmem:[#allocation8] sm:$0xff] %v149
    // Predicated region
    $region34: #{tpu_custom_call.1} parent=1 // pred_check
      _
    $region35: #{tpu_custom_call.1} parent=1 // pred_check_branch
      %152 = sbr.rel (0) target = $region37
    $region36: #{tpu_custom_call.1} parent=1 // pred_region
      %154 = vsyncadd [#allocation4], 0
      %s156 = sshll.u32 [#allocation8], 4
      %s157 = int_to_ptr.vmem [resolvable:$true] %s156
      %s158 = sshll.u32 %s5, 4
      %s159 = int_to_ptr.hbm [resolvable:$true] %s158
      %161 = dma.vmem_to_hbm [thread:$0]  %s157, 128, %s159, [#allocation4]
    $region37: #{tpu_custom_call.1} parent=1 // pred_fallthru
      _
    // Predicated region
    $region38: #{tpu_custom_call.1} parent=1 // pred_check
      _
    $region39: #{tpu_custom_call.1} parent=1 // pred_check_branch
      %163 = sbr.rel (0) target = $region41
    $region40: #{tpu_custom_call.1} parent=1 // pred_region
      %165 = dma.done [#allocation4], 128
    $region41: #{tpu_custom_call.1} parent=1 // pred_fallthru
      _
    %166 = vsyncpa [#allocation3], 1
    %167 = vsyncpa [#allocation6], 1
    %168 = vsyncpa [#allocation4], 1

</llo_original>
